<compile_context>
chip_gen: v7x
topology: tpu7x:2x2x1
jax: 0.10.0
libtpu: 0.0.40
codegen_flags: <defaults>
</compile_context>

<pallas_src>
import jax
import jax.numpy as jnp
from jax import lax
from jax.experimental import pallas as pl
from jax.experimental.pallas import tpu as pltpu

TEMPERATURE = 0.5
COS_EPS = 1e-8     # F.cosine_similarity eps (clamps the norm)
EPS = 1e-9         # matches the PyTorch module's 1e-09


def _round_up(x, m):
    return (x + m - 1) // m * m


def _make_normalize_kernel(inv_sqrt_t):
    """Row-normalize + fold 1/sqrt(T); emit bf16 for the MXU."""
    def kernel(feat_ref, out_ref):
        x = feat_ref[...].astype(jnp.float32)                    # (tq, Dp)
        sq = jnp.sum(x * x, axis=-1, keepdims=True)              # (tq, 1)
        inv = lax.rsqrt(jnp.maximum(sq, COS_EPS * COS_EPS)) * inv_sqrt_t
        out_ref[...] = (x * inv).astype(jnp.bfloat16)
    return kernel


def _make_row_block_kernel(tq, b_true, b_pad, inv_t):
    padded_cols = b_pad != b_true   # trace-time flag

    def kernel(q_ref, k_ref, lab_row_ref, lab_col_ref, out_ref):
        i = pl.program_id(0)
        qn = q_ref[...]                                          # (tq, Dp) bf16
        kn = k_ref[...]                                          # (Bp, Dp) bf16

        # Pairwise cosine / T for this row block: bf16 operands, f32 acc,
        # both operands contracted on the lane (D) axis -> no transpose.
        sim = lax.dot_general(qn, kn, (((1,), (1,)), ((), ())),
                              preferred_element_type=jnp.float32)  # (tq, Bp)

        # Analytic row max: cos(x,x) == 1 after normalization => max = 1/T.
        logits = sim - inv_t                                     # (tq, Bp)

        # Exact eye mask for this row block (no full (B,B) eye materialized
        # in f32, just a compare feeding a select).
        row_ids = lax.broadcasted_iota(jnp.int32, (tq, b_pad), 0) + i * tq
        col_ids = lax.broadcasted_iota(jnp.int32, (tq, b_pad), 1)
        keep = row_ids != col_ids                                # denom mask
        pos = lab_row_ref[...] == lab_col_ref[...]               # positives (incl. diag)
        if padded_cols:
            col_valid = col_ids < b_true
            keep = jnp.logical_and(keep, col_valid)
            pos = jnp.logical_and(pos, col_valid)

        # Softmax denominator with the diagonal (and padded cols) zeroed
        # exactly, like the reference eye mask.
        denom = jnp.sum(jnp.where(keep, jnp.exp(logits), 0.0),
                        axis=1, keepdims=True)                   # (tq, 1)

        # Per-row factorization: never materialize log_prob.
        pos_logit_sum = jnp.sum(jnp.where(pos, logits, 0.0),
                                axis=1, keepdims=True)           # (tq, 1)
        pos_cnt = jnp.sum(jnp.where(pos, 1.0, 0.0),
                          axis=1, keepdims=True)                 # (tq, 1)
        out_ref[...] = (pos_logit_sum
                        - pos_cnt * jnp.log(denom + EPS)) / (pos_cnt + EPS)
    return kernel


def ntxent_loss(features, labels, temperature=TEMPERATURE):
    """features: (B, D) float (any float dtype); labels: (B,) int.

    Returns scalar float32 loss matching the PyTorch NTXentLoss forward.
    """
    B, D = features.shape
    Dp = _round_up(D, 128)

    TQ_MAX = 256
    if B <= TQ_MAX:
        Bp = _round_up(B, 8)
        tq = Bp
    else:
        Bp = _round_up(B, TQ_MAX)
        tq = TQ_MAX
    n_blocks = Bp // tq

    # Zero-pad to lane/sublane-dense tiles; zeros change neither row norms nor
    # dot products. Padded rows/cols are masked in-kernel / sliced out below.
    feats = features
    if (Bp, Dp) != (B, D):
        feats = jnp.pad(features, ((0, Bp - B), (0, Dp - D)))
    labs = labels.astype(jnp.int32)
    if Bp != B:
        labs = jnp.pad(labs, (0, Bp - B), constant_values=-1)
    lab_row = labs.reshape(Bp, 1)
    lab_col = labs.reshape(1, Bp)

    inv_t = 1.0 / float(temperature)
    inv_sqrt_t = float(temperature) ** -0.5

    # Prologue: normalize every row once (keys == queries), output bf16.
    xn = pl.pallas_call(
        _make_normalize_kernel(inv_sqrt_t),
        out_shape=jax.ShapeDtypeStruct((Bp, Dp), jnp.bfloat16),
        grid=(n_blocks,),
        in_specs=[pl.BlockSpec((tq, Dp), lambda i: (i, 0))],
        out_specs=pl.BlockSpec((tq, Dp), lambda i: (i, 0)),
        compiler_params=pltpu.CompilerParams(
            dimension_semantics=("parallel",)),
    )(feats)

    # Working-set estimate for the main kernel: resident bf16 keys +
    # double-buffered q/label/out blocks + a few (tq, Bp) f32 intermediates.
    working = (2 * Bp * Dp * 2          # resident keys (double-buffered)
               + 2 * tq * Dp * 2        # q block
               + 2 * 8 * Bp * 4         # (1, Bp) label row, sublane-padded
               + 2 * 2 * tq * 128 * 4   # (tq, 1) labels + per-row output
               + 5 * tq * Bp * 4)       # sim / exp / mask slabs
    vmem_limit = int(min(48 * 2**20, max(32 * 2**20, 2 * working)))

    per_row = pl.pallas_call(
        _make_row_block_kernel(tq, B, Bp, inv_t),
        out_shape=jax.ShapeDtypeStruct((Bp, 1), jnp.float32),
        grid=(n_blocks,),
        in_specs=[
            pl.BlockSpec((tq, Dp), lambda i: (i, 0)),   # q rows (this block)
            pl.BlockSpec((Bp, Dp), lambda i: (0, 0)),   # resident keys
            pl.BlockSpec((tq, 1), lambda i: (i, 0)),    # row labels
            pl.BlockSpec((1, Bp), lambda i: (0, 0)),    # col labels
        ],
        out_specs=pl.BlockSpec((tq, 1), lambda i: (i, 0)),
        compiler_params=pltpu.CompilerParams(
            dimension_semantics=("parallel",),
            vmem_limit_bytes=vmem_limit),
    )(xn, xn, lab_row, lab_col)

    # Final mean over the true batch, negated (tiny wrapper-side reduction so
    # the row-block grid axis stays fully parallel / race-free).
    return -jnp.sum(per_row[:B, 0]) / B


def _ntxent_ref(features, labels, temperature=TEMPERATURE):
    # Pure-JAX reference mirroring the PyTorch module exactly (f32 math).
    x = features.astype(jnp.float32)
    B = x.shape[0]
    norm = jnp.maximum(jnp.linalg.norm(x, axis=-1, keepdims=True), COS_EPS)
    xn = x / norm
    sim = (xn @ xn.T) / temperature
    mask = (labels[:, None] == labels[None, :]).astype(jnp.float32)
    logits = sim - jnp.max(sim, axis=1, keepdims=True)
    exp_logits = jnp.exp(logits) * (1.0 - jnp.eye(B, dtype=jnp.float32))
    log_prob = logits - jnp.log(jnp.sum(exp_logits, axis=1, keepdims=True) + EPS)
    mean_log_prob_pos = jnp.sum(mask * log_prob, axis=1) / (jnp.sum(mask, axis=1) + EPS)
    return -jnp.mean(mean_log_prob_pos)


if __name__ == "__main__":
    key = jax.random.PRNGKey(0)
    kf, kl = jax.random.split(key)
    B, D = 8, 32
    features = jax.random.normal(kf, (B, D), dtype=jnp.float32)
    labels = jax.random.randint(kl, (B,), 0, 3, dtype=jnp.int32)

    loss = jax.block_until_ready(ntxent_loss(features, labels))
    ref = jax.block_until_ready(_ntxent_ref(features, labels))

    # Tolerance loosened vs. the f32 reference because MXU operands are bf16
    # (f32 accumulation), as recommended in the perf review.
    assert jnp.allclose(loss, ref, atol=5e-2, rtol=5e-2), (loss, ref)
    print("KERNEL_OK")
</pallas_src>

<mosaic_0001>
module attributes {stable_mosaic.version = 11 : i64} {
  func.func @kernel(%arg0: i32, %arg1: memref<8x128xf32, #tpu.memory_space<vmem>>, %arg2: memref<8x128xbf16, #tpu.memory_space<vmem>>) attributes {dimension_semantics = [#tpu.dimension_semantics<parallel>], iteration_bounds = array<i64: 1>, scalar_prefetch = 0 : i64, scratch_operands = 0 : i64, tpu.core_type = #tpu.core_type<tc>, window_params = [{transform_indices = @transform_0, window_bounds = array<i64: 8, 128>}, {transform_indices = @transform_1, window_bounds = array<i64: 8, 128>}]} {
    %c0 = arith.constant 0 : index
    %c0_0 = arith.constant 0 : index
    %0 = vector.load %arg1[%c0, %c0_0] : memref<8x128xf32, #tpu.memory_space<vmem>>, vector<8x128xf32>
    %1 = arith.mulf %0, %0 : vector<8x128xf32>
    %cst = arith.constant dense<0.000000e+00> : vector<8xf32>
    %2 = vector.multi_reduction <add>, %1, %cst [1] : vector<8x128xf32> to vector<8xf32>
    %3 = vector.shape_cast %2 : vector<8xf32> to vector<8x1xf32>
    %cst_1 = arith.constant 1.000000e-16 : f32
    %4 = vector.broadcast %cst_1 : f32 to vector<8x1xf32>
    %5 = arith.maximumf %3, %4 : vector<8x1xf32>
    %6 = math.rsqrt %5 : vector<8x1xf32>
    %cst_2 = arith.constant 1.41421354 : f32
    %7 = vector.broadcast %cst_2 : f32 to vector<8x1xf32>
    %8 = arith.mulf %6, %7 : vector<8x1xf32>
    %9 = vector.broadcast %8 : vector<8x1xf32> to vector<8x128xf32>
    %10 = arith.mulf %0, %9 : vector<8x128xf32>
    %11 = arith.truncf %10 : vector<8x128xf32> to vector<8x128xbf16>
    %c0_3 = arith.constant 0 : index
    %c0_4 = arith.constant 0 : index
    %12 = vector.load %arg2[%c0_3, %c0_4] : memref<8x128xbf16, #tpu.memory_space<vmem>>, vector<8x128xbf16>
    tpu.vector_store %arg2[%c0_3, %c0_4], %11 {strides = array<i32>} : memref<8x128xbf16, #tpu.memory_space<vmem>>, vector<8x128xbf16>,
    return
  }
  func.func @transform_0(%arg0: i32) -> (i32, i32) {
    %c0_i32 = arith.constant 0 : i32
    %c0_i32_0 = arith.constant 0 : i32
    return %arg0, %c0_i32 : i32, i32
  }
  func.func @transform_1(%arg0: i32) -> (i32, i32) {
    %c0_i32 = arith.constant 0 : i32
    %c0_i32_0 = arith.constant 0 : i32
    return %arg0, %c0_i32 : i32, i32
  }
}

</mosaic_0001>

<llo_original>
// kernel: tpu_custom_call.1
$region0: #{tpu_custom_call.1}
  #allocation0 [shape = 'u32[]', space=smem, size = 0x4, offset = 0x4, fixed_abs, tag = 'smem constant byte address 0x4 - core index']
  #allocation1 [shape = 'u32[144,128]{1,0:T(1,128)}', space=vmem, size = 0x12000, scoped, tag = 'internal scratch']
  %s0 = inlined_call_operand.hbm [shape: f32[8,128], index: 0, kind: input, shape index: {}]
  %s1 = inlined_call_operand.hbm [shape: bf16[8,128], index: 1, kind: output, shape index: {}]
  %s2 = sld [smem:[#allocation0]]
  $region18: #{tpu_custom_call.1} parent=0
    _
  %s4 = ssub.s32 1, %s2
  %s5 = scalar_select 0, %s4, %s2
  $region1: #{tpu_custom_call.1} parent=0
    #allocation2 [shape = 'u8[4096]{0}', space=vmem, size = 0x1000, scoped, tag = 'input window, operand 0, single buffered']
    #allocation3 [shape = 's32[1]{0}', space=sflag, size = 0x4, scoped, tag = 'scoped memory for tpu_custom_call.1']
    #allocation4 [shape = 's32[1]{0}', space=sflag, size = 0x4, scoped, tag = 'scoped memory for tpu_custom_call.1']
    #allocation5 [shape = 'u8[2048]{0}', space=vmem, size = 0x800, scoped, tag = 'output window, operand 0, single buffered']
    %6 = vsyncpa [#allocation3], 0
    %7 = vsyncpa [#allocation4], 0
    // Predicated region
    $region2: #{tpu_custom_call.1} parent=1 // pred_check
      _
    $region3: #{tpu_custom_call.1} parent=1 // pred_check_branch
      %9 = sbr.rel (0) target = $region5
    $region4: #{tpu_custom_call.1} parent=1 // pred_region
      %s11 = ssub.s32 128, 128
      %12 = vsyncadd [#allocation3], %s11
      %s14 = sshll.u32 [#allocation2], 4
      %s15 = int_to_ptr.vmem [resolvable:$true] %s14
      %17 = dma.hbm_to_vmem [thread:$0]  %s0, 128, %s15, [#allocation3]
    $region5: #{tpu_custom_call.1} parent=1 // pred_fallthru
      _
    // Predicated region
    $region6: #{tpu_custom_call.1} parent=1 // pred_check
      _
    $region7: #{tpu_custom_call.1} parent=1 // pred_check_branch
      %19 = sbr.rel (0) target = $region9
    $region8: #{tpu_custom_call.1} parent=1 // pred_region
      %20 = dma.done [#allocation3], 128
    $region9: #{tpu_custom_call.1} parent=1 // pred_fallthru
      _
    %v21 = vld [vmem:[#allocation2] sm:$0xff]
    %v22 = vmul.f32 %v21, %v21
    %23 = vadd.xlane.f32.xlu0 %v22
    %v24 = vpop.xlane.xlu0 %23
    %v25 = vmax.f32 %v24, 1e-16
    %v26 = vrsqrt.pop %v25
    %v27 = vmul.f32 %v26, 1.4142135
    %v28 = vmul.f32 %v21, %v27
    %v29 = vpack.c.bf16 %v28, %v28
    %30 = vst [vmem:[#allocation5] sm:$0xf] %v29
    // Predicated region
    $region10: #{tpu_custom_call.1} parent=1 // pred_check
      _
    $region11: #{tpu_custom_call.1} parent=1 // pred_check_branch
      %32 = sbr.rel (0) target = $region13
    $region12: #{tpu_custom_call.1} parent=1 // pred_region
      %s34 = ssub.s32 64, 64
      %35 = vsyncadd [#allocation4], %s34
      %s37 = sshll.u32 [#allocation5], 4
      %s38 = int_to_ptr.vmem [resolvable:$true] %s37
      %40 = dma.vmem_to_hbm [thread:$0]  %s38, 64, %s1, [#allocation4]
    $region13: #{tpu_custom_call.1} parent=1 // pred_fallthru
      _
    // Predicated region
    $region14: #{tpu_custom_call.1} parent=1 // pred_check
      _
    $region15: #{tpu_custom_call.1} parent=1 // pred_check_branch
      %42 = sbr.rel (0) target = $region17
    $region16: #{tpu_custom_call.1} parent=1 // pred_region
      %43 = dma.done [#allocation4], 64
    $region17: #{tpu_custom_call.1} parent=1 // pred_fallthru
      _
    %44 = vsyncpa [#allocation3], 1
    %45 = vsyncpa [#allocation4], 1

</llo_original>
